<compile_context>
chip_gen: v7x
topology: tpu7x:2x2x1
jax: 0.10.0
libtpu: 0.0.40
codegen_flags: <defaults>
</compile_context>

<pallas_src>
import functools

import jax
import jax.numpy as jnp
from jax.experimental import pallas as pl
from jax.experimental.pallas import tpu as pltpu

IN_F = 1
HID_F = 10
OUT_F = 1
LANE = 128          # vreg lane width: 128 batch scalars packed per slab row
TILE_R_MAX = 4096   # slab rows per block: 4096*128*4 B = 2 MiB per buffer; in+out
                    # double-buffered ~8 MiB -> fits default scoped VMEM everywhere
SMALL_BATCH = 4096  # below this a fused jnp elementwise op beats any kernel launch


def _round_up(x, m):
    return (x + m - 1) // m * m


def _cdiv(a, b):
    return (a + b - 1) // b


def mlp_kernel(x_ref, w1_ref, b1_ref, w2_ref, b2_ref, o_ref):
    # x_ref : (tile_r, 128) VMEM -- 128 batch scalars per row (lane-dense)
    # w1_ref: (10,) SMEM   fc1 weight column (in_features == 1)
    # b1_ref: (10,) SMEM   fc1 bias
    # w2_ref: (10,) SMEM   fc2 weight row   (out_features == 1)
    # b2_ref: (1,)  SMEM   fc2 bias
    # o_ref : (tile_r, 128) VMEM -- lane-dense output slab
    x = x_ref[...]
    acc = jnp.zeros_like(x)
    # Unrolled at trace time: 10 scalar*vector FMAs + ReLU, all on the VPU.
    for j in range(HID_F):
        h = jnp.maximum(w1_ref[j] * x + b1_ref[j], 0.0)
        acc = acc + w2_ref[j] * h
    o_ref[...] = acc + b2_ref[0]


def prepare_params(w1, b1, w2, b2):
    """One-time conversion of PyTorch nn.Linear params (call at model-load time).

    w1: (10, 1), b1: (10,), w2: (1, 10), b2: (1,)  -- nn.Linear layout.
    """
    w1_vec = jnp.asarray(w1, jnp.float32).reshape(HID_F)
    b1_vec = jnp.asarray(b1, jnp.float32).reshape(HID_F)
    w2_vec = jnp.asarray(w2, jnp.float32).reshape(HID_F)
    b2_vec = jnp.asarray(b2, jnp.float32).reshape(OUT_F)
    return w1_vec, b1_vec, w2_vec, b2_vec


@functools.partial(jax.jit, static_argnames=("min_pallas_batch",))
def simple_nn_forward(x, w1_vec, b1_vec, w2_vec, b2_vec,
                      min_pallas_batch=SMALL_BATCH):
    """x: (B, 1) float32 -> (B, 1) float32."""
    B = x.shape[0]
    x_flat = x.reshape(-1)

    if B < min_pallas_batch:
        # Tiny batches: a single fused XLA elementwise op beats any kernel launch.
        h = jnp.maximum(x_flat[:, None] * w1_vec + b1_vec, 0.0)
        return jnp.sum(h * w2_vec, axis=-1, keepdims=True) + b2_vec[0]

    # Pack the batch lane-dense: 128 scalars per slab row.
    b_pad = _round_up(B, LANE)
    if b_pad != B:
        # <= 127 elements of padding; skipped entirely when B % 128 == 0.
        x_flat = jnp.pad(x_flat, (0, b_pad - B))
    R = b_pad // LANE
    x_slab = x_flat.reshape(R, LANE)   # contiguous row-major -> layout-only reshape

    if R <= 8:
        tile_r = R                                        # single (R, 128) block
    else:
        # >= 2 grid steps so the "parallel" axis shards across both v7x TCs.
        tile_r = min(TILE_R_MAX, _round_up(_cdiv(R, 2), 8))
    grid = (_cdiv(R, tile_r),)

    out_slab = pl.pallas_call(
        mlp_kernel,
        out_shape=jax.ShapeDtypeStruct((R, LANE), jnp.float32),
        grid=grid,
        in_specs=[
            pl.BlockSpec((tile_r, LANE), lambda i: (i, 0)),      # x slab, tiled
            pl.BlockSpec(memory_space=pltpu.MemorySpace.SMEM),   # w1 scalars
            pl.BlockSpec(memory_space=pltpu.MemorySpace.SMEM),   # b1 scalars
            pl.BlockSpec(memory_space=pltpu.MemorySpace.SMEM),   # w2 scalars
            pl.BlockSpec(memory_space=pltpu.MemorySpace.SMEM),   # b2 scalar
        ],
        out_specs=pl.BlockSpec((tile_r, LANE), lambda i: (i, 0)),
        compiler_params=pltpu.CompilerParams(
            dimension_semantics=("parallel",)),                  # 2 TCs on v7x
    )(x_slab, w1_vec, b1_vec, w2_vec, b2_vec)

    # Lane-dense slab -> (B, 1); free when B is a multiple of 128.
    return out_slab.reshape(b_pad, 1)[:B]


def _reference(x, w1, b1, w2, b2):
    return jnp.maximum(x @ w1.T + b1, 0.0) @ w2.T + b2


if __name__ == "__main__":
    key = jax.random.PRNGKey(0)
    k_w1, k_b1, k_w2, k_b2, k_x1, k_x2, k_x3, k_x4 = jax.random.split(key, 8)

    # Deterministic parameters in PyTorch nn.Linear layout.
    w1 = jax.random.normal(k_w1, (HID_F, IN_F), jnp.float32) * 0.5
    b1 = jax.random.normal(k_b1, (HID_F,), jnp.float32) * 0.1
    w2 = jax.random.normal(k_w2, (OUT_F, HID_F), jnp.float32) * 0.5
    b2 = jax.random.normal(k_b2, (OUT_F,), jnp.float32) * 0.1

    # One-time parameter conversion (model-load time).
    params = prepare_params(w1, b1, w2, b2)

    # 1) Small batch forced through the Pallas kernel: single (1, 128) block.
    x1 = jax.random.normal(k_x1, (8, IN_F), jnp.float32)
    out1 = jax.block_until_ready(simple_nn_forward(x1, *params, min_pallas_batch=0))
    assert out1.shape == (8, OUT_F)
    assert jnp.allclose(out1, _reference(x1, w1, b1, w2, b2), atol=1e-5)

    # 2) Non-multiple-of-128 batch through the kernel: exercises the pad path.
    x2 = jax.random.normal(k_x2, (300, IN_F), jnp.float32)
    out2 = jax.block_until_ready(simple_nn_forward(x2, *params, min_pallas_batch=0))
    assert out2.shape == (300, OUT_F)
    assert jnp.allclose(out2, _reference(x2, w1, b1, w2, b2), atol=1e-5)

    # 3) Multiple-of-128 batch with >8 slab rows: 2-step grid, "parallel" axis
    #    (both TensorCores get work on v7x), no wrapper pad copy at all.
    x3 = jax.random.normal(k_x3, (2048, IN_F), jnp.float32)
    out3 = jax.block_until_ready(simple_nn_forward(x3, *params, min_pallas_batch=0))
    assert out3.shape == (2048, OUT_F)
    assert jnp.allclose(out3, _reference(x3, w1, b1, w2, b2), atol=1e-5)

    # 4) Default dispatch for a tiny batch: plain-jnp fused fallback path.
    x4 = jax.random.normal(k_x4, (37, IN_F), jnp.float32)
    out4 = jax.block_until_ready(simple_nn_forward(x4, *params))
    assert out4.shape == (37, OUT_F)
    assert jnp.allclose(out4, _reference(x4, w1, b1, w2, b2), atol=1e-5)

    print("KERNEL_OK")
</pallas_src>

<mosaic_0001>
module attributes {stable_mosaic.version = 11 : i64} {
  func.func @mlp_kernel(%arg0: i32, %arg1: memref<1x128xf32, #tpu.memory_space<vmem>>, %arg2: memref<10xf32, #tpu.memory_space<smem>>, %arg3: memref<10xf32, #tpu.memory_space<smem>>, %arg4: memref<10xf32, #tpu.memory_space<smem>>, %arg5: memref<1xf32, #tpu.memory_space<smem>>, %arg6: memref<1x128xf32, #tpu.memory_space<vmem>>) attributes {dimension_semantics = [#tpu.dimension_semantics<parallel>], iteration_bounds = array<i64: 1>, scalar_prefetch = 0 : i64, scratch_operands = 0 : i64, tpu.core_type = #tpu.core_type<tc>, window_params = [{transform_indices = @transform_0, window_bounds = array<i64: 1, 128>}, {transform_indices = @transform_1, window_bounds = array<i64: 10>}, {transform_indices = @transform_2, window_bounds = array<i64: 10>}, {transform_indices = @transform_3, window_bounds = array<i64: 10>}, {transform_indices = @transform_4, window_bounds = array<i64: 1>}, {transform_indices = @transform_5, window_bounds = array<i64: 1, 128>}]} {
    %c0 = arith.constant 0 : index
    %c0_0 = arith.constant 0 : index
    %0 = vector.load %arg1[%c0, %c0_0] : memref<1x128xf32, #tpu.memory_space<vmem>>, vector<1x128xf32>
    %cst = arith.constant 0.000000e+00 : f32
    %1 = vector.broadcast %cst : f32 to vector<1x128xf32>
    %c0_1 = arith.constant 0 : index
    %2 = memref.load %arg2[%c0_1] : memref<10xf32, #tpu.memory_space<smem>>
    %3 = vector.broadcast %2 : f32 to vector<1x128xf32>
    %4 = arith.mulf %3, %0 : vector<1x128xf32>
    %c0_2 = arith.constant 0 : index
    %5 = memref.load %arg3[%c0_2] : memref<10xf32, #tpu.memory_space<smem>>
    %6 = vector.broadcast %5 : f32 to vector<1x128xf32>
    %7 = arith.addf %4, %6 : vector<1x128xf32>
    %cst_3 = arith.constant 0.000000e+00 : f32
    %8 = vector.broadcast %cst_3 : f32 to vector<1x128xf32>
    %9 = arith.maximumf %7, %8 : vector<1x128xf32>
    %c0_4 = arith.constant 0 : index
    %10 = memref.load %arg4[%c0_4] : memref<10xf32, #tpu.memory_space<smem>>
    %11 = vector.broadcast %10 : f32 to vector<1x128xf32>
    %12 = arith.mulf %11, %9 : vector<1x128xf32>
    %13 = arith.addf %1, %12 : vector<1x128xf32>
    %c1 = arith.constant 1 : index
    %14 = memref.load %arg2[%c1] : memref<10xf32, #tpu.memory_space<smem>>
    %15 = vector.broadcast %14 : f32 to vector<1x128xf32>
    %16 = arith.mulf %15, %0 : vector<1x128xf32>
    %c1_5 = arith.constant 1 : index
    %17 = memref.load %arg3[%c1_5] : memref<10xf32, #tpu.memory_space<smem>>
    %18 = vector.broadcast %17 : f32 to vector<1x128xf32>
    %19 = arith.addf %16, %18 : vector<1x128xf32>
    %cst_6 = arith.constant 0.000000e+00 : f32
    %20 = vector.broadcast %cst_6 : f32 to vector<1x128xf32>
    %21 = arith.maximumf %19, %20 : vector<1x128xf32>
    %c1_7 = arith.constant 1 : index
    %22 = memref.load %arg4[%c1_7] : memref<10xf32, #tpu.memory_space<smem>>
    %23 = vector.broadcast %22 : f32 to vector<1x128xf32>
    %24 = arith.mulf %23, %21 : vector<1x128xf32>
    %25 = arith.addf %13, %24 : vector<1x128xf32>
    %c2 = arith.constant 2 : index
    %26 = memref.load %arg2[%c2] : memref<10xf32, #tpu.memory_space<smem>>
    %27 = vector.broadcast %26 : f32 to vector<1x128xf32>
    %28 = arith.mulf %27, %0 : vector<1x128xf32>
    %c2_8 = arith.constant 2 : index
    %29 = memref.load %arg3[%c2_8] : memref<10xf32, #tpu.memory_space<smem>>
    %30 = vector.broadcast %29 : f32 to vector<1x128xf32>
    %31 = arith.addf %28, %30 : vector<1x128xf32>
    %cst_9 = arith.constant 0.000000e+00 : f32
    %32 = vector.broadcast %cst_9 : f32 to vector<1x128xf32>
    %33 = arith.maximumf %31, %32 : vector<1x128xf32>
    %c2_10 = arith.constant 2 : index
    %34 = memref.load %arg4[%c2_10] : memref<10xf32, #tpu.memory_space<smem>>
    %35 = vector.broadcast %34 : f32 to vector<1x128xf32>
    %36 = arith.mulf %35, %33 : vector<1x128xf32>
    %37 = arith.addf %25, %36 : vector<1x128xf32>
    %c3 = arith.constant 3 : index
    %38 = memref.load %arg2[%c3] : memref<10xf32, #tpu.memory_space<smem>>
    %39 = vector.broadcast %38 : f32 to vector<1x128xf32>
    %40 = arith.mulf %39, %0 : vector<1x128xf32>
    %c3_11 = arith.constant 3 : index
    %41 = memref.load %arg3[%c3_11] : memref<10xf32, #tpu.memory_space<smem>>
    %42 = vector.broadcast %41 : f32 to vector<1x128xf32>
    %43 = arith.addf %40, %42 : vector<1x128xf32>
    %cst_12 = arith.constant 0.000000e+00 : f32
    %44 = vector.broadcast %cst_12 : f32 to vector<1x128xf32>
    %45 = arith.maximumf %43, %44 : vector<1x128xf32>
    %c3_13 = arith.constant 3 : index
    %46 = memref.load %arg4[%c3_13] : memref<10xf32, #tpu.memory_space<smem>>
    %47 = vector.broadcast %46 : f32 to vector<1x128xf32>
    %48 = arith.mulf %47, %45 : vector<1x128xf32>
    %49 = arith.addf %37, %48 : vector<1x128xf32>
    %c4 = arith.constant 4 : index
    %50 = memref.load %arg2[%c4] : memref<10xf32, #tpu.memory_space<smem>>
    %51 = vector.broadcast %50 : f32 to vector<1x128xf32>
    %52 = arith.mulf %51, %0 : vector<1x128xf32>
    %c4_14 = arith.constant 4 : index
    %53 = memref.load %arg3[%c4_14] : memref<10xf32, #tpu.memory_space<smem>>
    %54 = vector.broadcast %53 : f32 to vector<1x128xf32>
    %55 = arith.addf %52, %54 : vector<1x128xf32>
    %cst_15 = arith.constant 0.000000e+00 : f32
    %56 = vector.broadcast %cst_15 : f32 to vector<1x128xf32>
    %57 = arith.maximumf %55, %56 : vector<1x128xf32>
    %c4_16 = arith.constant 4 : index
    %58 = memref.load %arg4[%c4_16] : memref<10xf32, #tpu.memory_space<smem>>
    %59 = vector.broadcast %58 : f32 to vector<1x128xf32>
    %60 = arith.mulf %59, %57 : vector<1x128xf32>
    %61 = arith.addf %49, %60 : vector<1x128xf32>
    %c5 = arith.constant 5 : index
    %62 = memref.load %arg2[%c5] : memref<10xf32, #tpu.memory_space<smem>>
    %63 = vector.broadcast %62 : f32 to vector<1x128xf32>
    %64 = arith.mulf %63, %0 : vector<1x128xf32>
    %c5_17 = arith.constant 5 : index
    %65 = memref.load %arg3[%c5_17] : memref<10xf32, #tpu.memory_space<smem>>
    %66 = vector.broadcast %65 : f32 to vector<1x128xf32>
    %67 = arith.addf %64, %66 : vector<1x128xf32>
    %cst_18 = arith.constant 0.000000e+00 : f32
    %68 = vector.broadcast %cst_18 : f32 to vector<1x128xf32>
    %69 = arith.maximumf %67, %68 : vector<1x128xf32>
    %c5_19 = arith.constant 5 : index
    %70 = memref.load %arg4[%c5_19] : memref<10xf32, #tpu.memory_space<smem>>
    %71 = vector.broadcast %70 : f32 to vector<1x128xf32>
    %72 = arith.mulf %71, %69 : vector<1x128xf32>
    %73 = arith.addf %61, %72 : vector<1x128xf32>
    %c6 = arith.constant 6 : index
    %74 = memref.load %arg2[%c6] : memref<10xf32, #tpu.memory_space<smem>>
    %75 = vector.broadcast %74 : f32 to vector<1x128xf32>
    %76 = arith.mulf %75, %0 : vector<1x128xf32>
    %c6_20 = arith.constant 6 : index
    %77 = memref.load %arg3[%c6_20] : memref<10xf32, #tpu.memory_space<smem>>
    %78 = vector.broadcast %77 : f32 to vector<1x128xf32>
    %79 = arith.addf %76, %78 : vector<1x128xf32>
    %cst_21 = arith.constant 0.000000e+00 : f32
    %80 = vector.broadcast %cst_21 : f32 to vector<1x128xf32>
    %81 = arith.maximumf %79, %80 : vector<1x128xf32>
    %c6_22 = arith.constant 6 : index
    %82 = memref.load %arg4[%c6_22] : memref<10xf32, #tpu.memory_space<smem>>
    %83 = vector.broadcast %82 : f32 to vector<1x128xf32>
    %84 = arith.mulf %83, %81 : vector<1x128xf32>
    %85 = arith.addf %73, %84 : vector<1x128xf32>
    %c7 = arith.constant 7 : index
    %86 = memref.load %arg2[%c7] : memref<10xf32, #tpu.memory_space<smem>>
    %87 = vector.broadcast %86 : f32 to vector<1x128xf32>
    %88 = arith.mulf %87, %0 : vector<1x128xf32>
    %c7_23 = arith.constant 7 : index
    %89 = memref.load %arg3[%c7_23] : memref<10xf32, #tpu.memory_space<smem>>
    %90 = vector.broadcast %89 : f32 to vector<1x128xf32>
    %91 = arith.addf %88, %90 : vector<1x128xf32>
    %cst_24 = arith.constant 0.000000e+00 : f32
    %92 = vector.broadcast %cst_24 : f32 to vector<1x128xf32>
    %93 = arith.maximumf %91, %92 : vector<1x128xf32>
    %c7_25 = arith.constant 7 : index
    %94 = memref.load %arg4[%c7_25] : memref<10xf32, #tpu.memory_space<smem>>
    %95 = vector.broadcast %94 : f32 to vector<1x128xf32>
    %96 = arith.mulf %95, %93 : vector<1x128xf32>
    %97 = arith.addf %85, %96 : vector<1x128xf32>
    %c8 = arith.constant 8 : index
    %98 = memref.load %arg2[%c8] : memref<10xf32, #tpu.memory_space<smem>>
    %99 = vector.broadcast %98 : f32 to vector<1x128xf32>
    %100 = arith.mulf %99, %0 : vector<1x128xf32>
    %c8_26 = arith.constant 8 : index
    %101 = memref.load %arg3[%c8_26] : memref<10xf32, #tpu.memory_space<smem>>
    %102 = vector.broadcast %101 : f32 to vector<1x128xf32>
    %103 = arith.addf %100, %102 : vector<1x128xf32>
    %cst_27 = arith.constant 0.000000e+00 : f32
    %104 = vector.broadcast %cst_27 : f32 to vector<1x128xf32>
    %105 = arith.maximumf %103, %104 : vector<1x128xf32>
    %c8_28 = arith.constant 8 : index
    %106 = memref.load %arg4[%c8_28] : memref<10xf32, #tpu.memory_space<smem>>
    %107 = vector.broadcast %106 : f32 to vector<1x128xf32>
    %108 = arith.mulf %107, %105 : vector<1x128xf32>
    %109 = arith.addf %97, %108 : vector<1x128xf32>
    %c9 = arith.constant 9 : index
    %110 = memref.load %arg2[%c9] : memref<10xf32, #tpu.memory_space<smem>>
    %111 = vector.broadcast %110 : f32 to vector<1x128xf32>
    %112 = arith.mulf %111, %0 : vector<1x128xf32>
    %c9_29 = arith.constant 9 : index
    %113 = memref.load %arg3[%c9_29] : memref<10xf32, #tpu.memory_space<smem>>
    %114 = vector.broadcast %113 : f32 to vector<1x128xf32>
    %115 = arith.addf %112, %114 : vector<1x128xf32>
    %cst_30 = arith.constant 0.000000e+00 : f32
    %116 = vector.broadcast %cst_30 : f32 to vector<1x128xf32>
    %117 = arith.maximumf %115, %116 : vector<1x128xf32>
    %c9_31 = arith.constant 9 : index
    %118 = memref.load %arg4[%c9_31] : memref<10xf32, #tpu.memory_space<smem>>
    %119 = vector.broadcast %118 : f32 to vector<1x128xf32>
    %120 = arith.mulf %119, %117 : vector<1x128xf32>
    %121 = arith.addf %109, %120 : vector<1x128xf32>
    %c0_32 = arith.constant 0 : index
    %122 = memref.load %arg5[%c0_32] : memref<1xf32, #tpu.memory_space<smem>>
    %123 = vector.broadcast %122 : f32 to vector<1x128xf32>
    %124 = arith.addf %121, %123 : vector<1x128xf32>
    %c0_33 = arith.constant 0 : index
    %c0_34 = arith.constant 0 : index
    %125 = vector.load %arg6[%c0_33, %c0_34] : memref<1x128xf32, #tpu.memory_space<vmem>>, vector<1x128xf32>
    tpu.vector_store %arg6[%c0_33, %c0_34], %124 {strides = array<i32>} : memref<1x128xf32, #tpu.memory_space<vmem>>, vector<1x128xf32>,
    return
  }
  func.func @transform_0(%arg0: i32) -> (i32, i32) {
    %c0_i32 = arith.constant 0 : i32
    %c0_i32_0 = arith.constant 0 : i32
    return %arg0, %c0_i32 : i32, i32
  }
  func.func @transform_1(%arg0: i32) -> i32 {
    %c0_i32 = arith.constant 0 : i32
    %c0_i32_0 = arith.constant 0 : i32
    return %c0_i32 : i32
  }
  func.func @transform_2(%arg0: i32) -> i32 {
    %c0_i32 = arith.constant 0 : i32
    %c0_i32_0 = arith.constant 0 : i32
    return %c0_i32 : i32
  }
  func.func @transform_3(%arg0: i32) -> i32 {
    %c0_i32 = arith.constant 0 : i32
    %c0_i32_0 = arith.constant 0 : i32
    return %c0_i32 : i32
  }
  func.func @transform_4(%arg0: i32) -> i32 {
    %c0_i32 = arith.constant 0 : i32
    %c0_i32_0 = arith.constant 0 : i32
    return %c0_i32 : i32
  }
  func.func @transform_5(%arg0: i32) -> (i32, i32) {
    %c0_i32 = arith.constant 0 : i32
    %c0_i32_0 = arith.constant 0 : i32
    return %arg0, %c0_i32 : i32, i32
  }
}

</mosaic_0001>

<llo_original>
// kernel: simple_nn_forward.1
$region0: #{simple_nn_forward.1}
  #allocation0 [shape = 'u32[]', space=smem, size = 0x4, offset = 0x4, fixed_abs, tag = 'smem constant byte address 0x4 - core index']
  #allocation1 [shape = 'u32[144,128]{1,0:T(1,128)}', space=vmem, size = 0x12000, scoped, tag = 'internal scratch']
  #allocation2 [shape = 'f32[1]{0:T(128)S(6)}', space=smem, size = 0x200, scoped, tag = 'scoped memory for simple_nn_forward.1']
  %s0 = inlined_call_operand.vmem [shape: f32[1,128], index: 0, kind: input, shape index: {}]
  %s1 = inlined_call_operand.vmem [shape: f32[10], index: 1, kind: input, shape index: {}]
  %s2 = inlined_call_operand.vmem [shape: f32[10], index: 2, kind: input, shape index: {}]
  %s3 = inlined_call_operand.vmem [shape: f32[10], index: 3, kind: input, shape index: {}]
  %s4 = inlined_call_operand.<no memory space> [shape: f32[1], index: 4, kind: input, shape index: {}]
  %s5 = inlined_call_operand.vmem [shape: f32[1,128], index: 5, kind: output, shape index: {}]
  %s6 = sld [smem:[#allocation0]]
  $region42: #{simple_nn_forward.1} parent=0
    _
  %s8 = ssub.s32 1, %s6
  %s9 = scalar_select 0, %s8, %s6
  %10 = sst [smem:[#allocation2]] %s4
  $region1: #{simple_nn_forward.1} parent=0
    #allocation3 [shape = 'u8[512]{0}', space=smem, size = 0x200, scoped, tag = 'input window, operand 1, single buffered']
    #allocation4 [shape = 's32[1]{0}', space=sflag, size = 0x4, scoped, tag = 'scoped memory for simple_nn_forward.1']
    #allocation5 [shape = 'u8[512]{0}', space=smem, size = 0x200, scoped, tag = 'input window, operand 2, single buffered']
    #allocation6 [shape = 's32[1]{0}', space=sflag, size = 0x4, scoped, tag = 'scoped memory for simple_nn_forward.1']
    #allocation7 [shape = 'u8[512]{0}', space=smem, size = 0x200, scoped, tag = 'input window, operand 3, single buffered']
    %11 = vsyncpa [#allocation4], 0
    %12 = vsyncpa [#allocation6], 0
    // Predicated region
    $region2: #{simple_nn_forward.1} parent=1 // pred_check
      _
    $region3: #{simple_nn_forward.1} parent=1 // pred_check_branch
      %14 = sbr.rel (0) target = $region5
    $region4: #{simple_nn_forward.1} parent=1 // pred_region
      _
    $region5: #{simple_nn_forward.1} parent=1 // pred_fallthru
      _
    // Predicated region
    $region6: #{simple_nn_forward.1} parent=1 // pred_check
      _
    $region7: #{simple_nn_forward.1} parent=1 // pred_check_branch
      %16 = sbr.rel (0) target = $region9
    $region8: #{simple_nn_forward.1} parent=1 // pred_region
      %s18 = ssub.s32 16, 16
      %19 = vsyncadd [#allocation4], %s18
      %s21 = sshll.u32 %s1, 4
      %s22 = int_to_ptr.vmem [resolvable:$true] %s21
      %24 = dma.vmem_to_smem %s22, 16, [#allocation3], [#allocation4]
    $region9: #{simple_nn_forward.1} parent=1 // pred_fallthru
      _
    // Predicated region
    $region10: #{simple_nn_forward.1} parent=1 // pred_check
      _
    $region11: #{simple_nn_forward.1} parent=1 // pred_check_branch
      %26 = sbr.rel (0) target = $region13
    $region12: #{simple_nn_forward.1} parent=1 // pred_region
      %s28 = ssub.s32 16, 16
      %29 = vsyncadd [#allocation6], %s28
      %s31 = sshll.u32 %s2, 4
      %s32 = int_to_ptr.vmem [resolvable:$true] %s31
      %34 = dma.vmem_to_smem %s32, 16, [#allocation5], [#allocation6]
    $region13: #{simple_nn_forward.1} parent=1 // pred_fallthru
      _
    // Predicated region
    $region14: #{simple_nn_forward.1} parent=1 // pred_check
      _
    $region15: #{simple_nn_forward.1} parent=1 // pred_check_branch
      %36 = sbr.rel (0) target = $region17
    $region16: #{simple_nn_forward.1} parent=1 // pred_region
      %s38 = ssub.s32 16, 16
      %39 = vsyncadd [#allocation6], %s38
      %s41 = sshll.u32 %s3, 4
      %s42 = int_to_ptr.vmem [resolvable:$true] %s41
      %44 = dma.vmem_to_smem %s42, 16, [#allocation7], [#allocation6]
    $region17: #{simple_nn_forward.1} parent=1 // pred_fallthru
      _
    // Predicated region
    $region18: #{simple_nn_forward.1} parent=1 // pred_check
      _
    $region19: #{simple_nn_forward.1} parent=1 // pred_check_branch
      %46 = sbr.rel (0) target = $region21
    $region20: #{simple_nn_forward.1} parent=1 // pred_region
      _
    $region21: #{simple_nn_forward.1} parent=1 // pred_fallthru
      _
    // Predicated region
    $region22: #{simple_nn_forward.1} parent=1 // pred_check
      _
    $region23: #{simple_nn_forward.1} parent=1 // pred_check_branch
      %48 = sbr.rel (0) target = $region25
    $region24: #{simple_nn_forward.1} parent=1 // pred_region
      %49 = dma.done [#allocation4], 16
    $region25: #{simple_nn_forward.1} parent=1 // pred_fallthru
      _
    // Predicated region
    $region26: #{simple_nn_forward.1} parent=1 // pred_check
      _
    $region27: #{simple_nn_forward.1} parent=1 // pred_check_branch
      %51 = sbr.rel (0) target = $region29
    $region28: #{simple_nn_forward.1} parent=1 // pred_region
      %52 = dma.done [#allocation6], 16
    $region29: #{simple_nn_forward.1} parent=1 // pred_fallthru
      _
    // Predicated region
    $region30: #{simple_nn_forward.1} parent=1 // pred_check
      _
    $region31: #{simple_nn_forward.1} parent=1 // pred_check_branch
      %54 = sbr.rel (0) target = $region33
    $region32: #{simple_nn_forward.1} parent=1 // pred_region
      %55 = dma.done [#allocation6], 16
    $region33: #{simple_nn_forward.1} parent=1 // pred_fallthru
      _
    %56 = sfence
    %v57 = vld [vmem:[%s0] sm:$0x1]
    %s58 = sld [smem:[#allocation3]]
    %v59 = vstv %s58
    %v60 = vmul.f32 %v59, %v57
    %s61 = sld [smem:[#allocation5]]
    %v62 = vstv %s61
    %v63 = vadd.f32 %v60, %v62
    %v64 = vmax.f32 %v63, 0.0
    %s65 = sld [smem:[#allocation7]]
    %v66 = vstv %s65
    %v67 = vmul.f32 %v66, %v64
    %v68 = vadd.f32 %v67, 0.0
    %s69 = sld [smem:[#allocation3 + $0x1]]
    %v70 = vstv %s69
    %v71 = vmul.f32 %v70, %v57
    %s72 = sld [smem:[#allocation5 + $0x1]]
    %v73 = vstv %s72
    %v74 = vadd.f32 %v71, %v73
    %v75 = vmax.f32 %v74, 0.0
    %s76 = sld [smem:[#allocation7 + $0x1]]
    %v77 = vstv %s76
    %v78 = vmul.f32 %v77, %v75
    %v79 = vadd.f32 %v68, %v78
    %s80 = sld [smem:[#allocation3 + $0x2]]
    %v81 = vstv %s80
    %v82 = vmul.f32 %v81, %v57
    %s83 = sld [smem:[#allocation5 + $0x2]]
    %v84 = vstv %s83
    %v85 = vadd.f32 %v82, %v84
    %v86 = vmax.f32 %v85, 0.0
    %s87 = sld [smem:[#allocation7 + $0x2]]
    %v88 = vstv %s87
    %v89 = vmul.f32 %v88, %v86
    %v90 = vadd.f32 %v79, %v89
    %s91 = sld [smem:[#allocation3 + $0x3]]
    %v92 = vstv %s91
    %v93 = vmul.f32 %v92, %v57
    %s94 = sld [smem:[#allocation5 + $0x3]]
    %v95 = vstv %s94
    %v96 = vadd.f32 %v93, %v95
    %v97 = vmax.f32 %v96, 0.0
    %s98 = sld [smem:[#allocation7 + $0x3]]
    %v99 = vstv %s98
    %v100 = vmul.f32 %v99, %v97
    %v101 = vadd.f32 %v90, %v100
    %s102 = sld [smem:[#allocation3 + $0x4]]
    %v103 = vstv %s102
    %v104 = vmul.f32 %v103, %v57
    %s105 = sld [smem:[#allocation5 + $0x4]]
    %v106 = vstv %s105
    %v107 = vadd.f32 %v104, %v106
    %v108 = vmax.f32 %v107, 0.0
    %s109 = sld [smem:[#allocation7 + $0x4]]
    %v110 = vstv %s109
    %v111 = vmul.f32 %v110, %v108
    %v112 = vadd.f32 %v101, %v111
    %s113 = sld [smem:[#allocation3 + $0x5]]
    %v114 = vstv %s113
    %v115 = vmul.f32 %v114, %v57
    %s116 = sld [smem:[#allocation5 + $0x5]]
    %v117 = vstv %s116
    %v118 = vadd.f32 %v115, %v117
    %v119 = vmax.f32 %v118, 0.0
    %s120 = sld [smem:[#allocation7 + $0x5]]
    %v121 = vstv %s120
    %v122 = vmul.f32 %v121, %v119
    %v123 = vadd.f32 %v112, %v122
    %s124 = sld [smem:[#allocation3 + $0x6]]
    %v125 = vstv %s124
    %v126 = vmul.f32 %v125, %v57
    %s127 = sld [smem:[#allocation5 + $0x6]]
    %v128 = vstv %s127
    %v129 = vadd.f32 %v126, %v128
    %v130 = vmax.f32 %v129, 0.0
    %s131 = sld [smem:[#allocation7 + $0x6]]
    %v132 = vstv %s131
    %v133 = vmul.f32 %v132, %v130
    %v134 = vadd.f32 %v123, %v133
    %s135 = sld [smem:[#allocation3 + $0x7]]
    %v136 = vstv %s135
    %v137 = vmul.f32 %v136, %v57
    %s138 = sld [smem:[#allocation5 + $0x7]]
    %v139 = vstv %s138
    %v140 = vadd.f32 %v137, %v139
    %v141 = vmax.f32 %v140, 0.0
    %s142 = sld [smem:[#allocation7 + $0x7]]
    %v143 = vstv %s142
    %v144 = vmul.f32 %v143, %v141
    %v145 = vadd.f32 %v134, %v144
    %s146 = sld [smem:[#allocation3 + $0x8]]
    %v147 = vstv %s146
    %v148 = vmul.f32 %v147, %v57
    %s149 = sld [smem:[#allocation5 + $0x8]]
    %v150 = vstv %s149
    %v151 = vadd.f32 %v148, %v150
    %v152 = vmax.f32 %v151, 0.0
    %s153 = sld [smem:[#allocation7 + $0x8]]
    %v154 = vstv %s153
    %v155 = vmul.f32 %v154, %v152
    %v156 = vadd.f32 %v145, %v155
    %s157 = sld [smem:[#allocation3 + $0x9]]
    %v158 = vstv %s157
    %v159 = vmul.f32 %v158, %v57
    %s160 = sld [smem:[#allocation5 + $0x9]]
    %v161 = vstv %s160
    %v162 = vadd.f32 %v159, %v161
    %v163 = vmax.f32 %v162, 0.0
    %s164 = sld [smem:[#allocation7 + $0x9]]
    %v165 = vstv %s164
    %v166 = vmul.f32 %v165, %v163
    %v167 = vadd.f32 %v156, %v166
    %s168 = sld [smem:[#allocation2]]
    %v169 = vstv %s168
    %v170 = vadd.f32 %v167, %v169
    %171 = vst [vmem:[%s5] sm:$0x1] %v170
    // Predicated region
    $region34: #{simple_nn_forward.1} parent=1 // pred_check
      _
    $region35: #{simple_nn_forward.1} parent=1 // pred_check_branch
      %173 = sbr.rel (0) target = $region37
    $region36: #{simple_nn_forward.1} parent=1 // pred_region
      _
    $region37: #{simple_nn_forward.1} parent=1 // pred_fallthru
      _
    // Predicated region
    $region38: #{simple_nn_forward.1} parent=1 // pred_check
      _
    $region39: #{simple_nn_forward.1} parent=1 // pred_check_branch
      %175 = sbr.rel (0) target = $region41
    $region40: #{simple_nn_forward.1} parent=1 // pred_region
      _
    $region41: #{simple_nn_forward.1} parent=1 // pred_fallthru
      _
    %176 = vsyncpa [#allocation4], 1
    %177 = vsyncpa [#allocation6], 1

</llo_original>
